<compile_context>
chip_gen: v7x
topology: tpu7x:2x2x1
jax: 0.10.0
libtpu: 0.0.40
codegen_flags: <defaults>
</compile_context>

<pallas_src>
import jax
import jax.numpy as jnp
from jax.experimental import pallas as pl
from jax.experimental.pallas import tpu as pltpu

_SQRT_2_OVER_PI = 0.7978845608028654


def _gelu_tanh(x):
    return 0.5 * x * (1.0 + jnp.tanh(_SQRT_2_OVER_PI * (x + 0.044715 * x * x * x)))


def _ffn_kernel(x_ref, w1_ref, b1_ref, w2_ref, b2_ref, o_ref, acc_ref):
    h_idx = pl.program_id(1)

    @pl.when(h_idx == 0)
    def _():
        acc_ref[...] = jnp.zeros_like(acc_ref)

    # First linear on this hidden slab: (tile_m, dim) @ (dim, tile_h), f32 acc.
    h = jnp.dot(x_ref[...], w1_ref[...], preferred_element_type=jnp.float32)
    h = _gelu_tanh(h + b1_ref[...].astype(jnp.float32))
    # Partial second linear: (tile_m, tile_h) @ (tile_h, dim), accumulated in f32.
    acc_ref[...] += jnp.dot(h.astype(w2_ref.dtype), w2_ref[...],
                            preferred_element_type=jnp.float32)

    @pl.when(h_idx == pl.num_programs(1) - 1)
    def _():
        o_ref[...] = (acc_ref[...] + b2_ref[...].astype(jnp.float32)).astype(o_ref.dtype)


def _vmem_bytes(tile_m, tile_h, dim, x_item, w_item):
    """Dtype-accurate VMEM estimate (double-buffering modelled explicitly)."""
    return (
        2 * tile_m * dim * x_item      # x row tile (double-buffered)
        + 2 * tile_m * dim * x_item    # y row tile (double-buffered)
        + 2 * dim * tile_h * w_item    # w1 slab (double-buffered)
        + 2 * tile_h * dim * w_item    # w2 slab (double-buffered)
        + 2 * tile_h * w_item          # b1 slab
        + 2 * dim * w_item             # b2
        + tile_m * dim * 4             # f32 accumulator scratch
        + 2 * tile_m * tile_h * 4      # f32 hidden-activation temps (slack)
    )


def _pick_tiles(m, dim, hidden, x_item, w_item, vmem_budget, num_cores, max_tile_m):
    # Hidden (reduction) slab must divide `hidden` exactly so no garbage columns
    # enter the accumulator. Prefer 512/256 (feeds the 256x256 MXU on v6e/v7x).
    if hidden % 128 == 0:
        tile_h = min(512, hidden)
        while hidden % tile_h != 0:
            tile_h //= 2
    else:
        tile_h = hidden

    # Row tile: as large as the VMEM budget allows (big MXU M, few grid steps).
    m8 = -(-m // 8) * 8
    tile_m = max(8, min((max_tile_m // 8) * 8, m8))
    while tile_m > 8 and _vmem_bytes(tile_m, tile_h, dim, x_item, w_item) > vmem_budget:
        tile_m = max(8, ((tile_m // 2) // 8) * 8)
    # Corner case (very large dim): shrink the hidden slab too.
    while (tile_h > 128 and hidden % (tile_h // 2) == 0
           and _vmem_bytes(tile_m, tile_h, dim, x_item, w_item) > vmem_budget):
        tile_h //= 2

    # Only split the (parallel) row axis further when the chip has >1 TensorCore
    # (v7x). On single-TC chips (v5e/v6e) the grid is a serial loop, so keep
    # tile_m as large as VMEM allows.
    if num_cores > 1:
        per_core = ((-(-m // (2 * num_cores))) // 8) * 8
        if per_core >= 8:
            tile_m = min(tile_m, per_core)

    if tile_m >= m:
        tile_m = m   # a single full-height block is always layout-legal
    return tile_m, tile_h


def feed_forward(x, params, *, max_tile_m=1024, compute_dtype=None):
    """x: (..., dim). params: w1 (dim, hidden) = linear1.weight.T, b1 (hidden,),
    w2 (hidden, dim) = linear2.weight.T, b2 (dim,). compute_dtype=jnp.bfloat16
    enables the bf16 MXU path (f32 accumulation either way)."""
    w1, b1, w2, b2 = params["w1"], params["b1"], params["w2"], params["b2"]
    orig_shape = x.shape
    dim = orig_shape[-1]
    hidden = w1.shape[1]

    if compute_dtype is not None:
        x = x.astype(compute_dtype)
        w1 = w1.astype(compute_dtype)
        w2 = w2.astype(compute_dtype)

    x2 = x.reshape(-1, dim)                    # free row-major view, no transpose
    m = x2.shape[0]
    x_item = jnp.dtype(x2.dtype).itemsize
    w_item = jnp.dtype(w1.dtype).itemsize

    # Per-generation VMEM budget: 85% of 128 MiB parts (v5e/v6e), 75% of 64 MiB
    # parts (v7x), with a conservative 64 MiB fallback if the query fails.
    try:
        vmem_physical = int(pltpu.get_tpu_info().vmem_capacity_bytes)
    except Exception:
        vmem_physical = 64 * 1024 * 1024
    frac = 0.85 if vmem_physical >= 100 * 1024 * 1024 else 0.75
    vmem_budget = int(frac * vmem_physical)

    try:
        num_cores = int(getattr(jax.devices()[0], "num_cores", 1) or 1)
    except Exception:
        num_cores = 1

    tile_m, tile_h = _pick_tiles(m, dim, hidden, x_item, w_item,
                                 vmem_budget, num_cores, max_tile_m)

    b1_2d = b1.reshape(1, hidden)
    b2_2d = b2.reshape(1, dim)

    grid = (pl.cdiv(m, tile_m), hidden // tile_h)   # no jnp.pad copy of x
    est = _vmem_bytes(tile_m, tile_h, dim, x_item, w_item)
    vmem_limit = int(min(max(est + (8 << 20), 32 << 20), vmem_budget))

    out = pl.pallas_call(
        _ffn_kernel,
        out_shape=jax.ShapeDtypeStruct((m, dim), x2.dtype),
        grid_spec=pltpu.PrefetchScalarGridSpec(
            num_scalar_prefetch=0,
            grid=grid,
            in_specs=[
                pl.BlockSpec((tile_m, dim), lambda i, h: (i, 0)),     # x rows
                pl.BlockSpec((dim, tile_h), lambda i, h: (0, h)),     # w1 slab
                pl.BlockSpec((1, tile_h), lambda i, h: (0, h)),       # b1 slab
                pl.BlockSpec((tile_h, dim), lambda i, h: (h, 0)),     # w2 slab
                pl.BlockSpec((1, dim), lambda i, h: (0, 0)),          # b2
            ],
            out_specs=pl.BlockSpec((tile_m, dim), lambda i, h: (i, 0)),
            scratch_shapes=[pltpu.VMEM((tile_m, dim), jnp.float32)],
        ),
        compiler_params=pltpu.CompilerParams(
            dimension_semantics=("parallel", "arbitrary"),
            vmem_limit_bytes=vmem_limit,
        ),
    )(x2, w1, b1_2d, w2, b2_2d)

    return out.reshape(orig_shape[:-1] + (dim,)).astype(x.dtype)


def _reference_forward(x, params):
    """Pure-JAX reference (same GELU formula; highest-precision matmuls)."""
    h = jnp.dot(x, params["w1"], precision=jax.lax.Precision.HIGHEST) + params["b1"]
    h = _gelu_tanh(h)
    return jnp.dot(h, params["w2"], precision=jax.lax.Precision.HIGHEST) + params["b2"]


if __name__ == "__main__":
    key = jax.random.PRNGKey(0)
    k_x, k_w1, k_b1, k_w2, k_b2 = jax.random.split(key, 5)

    # --- Test 1: module-sized demo (dim multiple of 128 -> lane-dense IO). ---
    batch, seq, dim, hidden_dim = 2, 8, 128, 256
    x = jax.random.normal(k_x, (batch, seq, dim), dtype=jnp.float32)
    params = {
        # nn.Linear(dim, hidden_dim): weight (hidden, dim) stored transposed.
        "w1": 0.1 * jax.random.normal(k_w1, (dim, hidden_dim), dtype=jnp.float32),
        "b1": 0.1 * jax.random.normal(k_b1, (hidden_dim,), dtype=jnp.float32),
        # nn.Linear(hidden_dim, dim): weight (dim, hidden) stored transposed.
        "w2": 0.1 * jax.random.normal(k_w2, (hidden_dim, dim), dtype=jnp.float32),
        "b2": 0.1 * jax.random.normal(k_b2, (dim,), dtype=jnp.float32),
    }
    out = jax.block_until_ready(feed_forward(x, params))
    ref = jax.block_until_ready(_reference_forward(x, params))
    assert out.shape == (batch, seq, dim)
    assert jnp.allclose(out, ref, atol=1e-2, rtol=1e-2)

    # --- Test 2: exercise multi-step hidden accumulation + multi-row-tile grid
    #     at small size (grid = (2, 2) with max_tile_m=64, tile_h=512). ---
    batch2, seq2, dim2, hidden2 = 2, 64, 128, 1024
    x_b = jax.random.normal(k_x, (batch2, seq2, dim2), dtype=jnp.float32)
    params_b = {
        "w1": 0.05 * jax.random.normal(k_w1, (dim2, hidden2), dtype=jnp.float32),
        "b1": 0.05 * jax.random.normal(k_b1, (hidden2,), dtype=jnp.float32),
        "w2": 0.05 * jax.random.normal(k_w2, (hidden2, dim2), dtype=jnp.float32),
        "b2": 0.05 * jax.random.normal(k_b2, (dim2,), dtype=jnp.float32),
    }
    out_b = jax.block_until_ready(feed_forward(x_b, params_b, max_tile_m=64))
    ref_b = jax.block_until_ready(_reference_forward(x_b, params_b))
    assert out_b.shape == (batch2, seq2, dim2)
    assert jnp.allclose(out_b, ref_b, atol=1e-2, rtol=1e-2)

    print("KERNEL_OK")
</pallas_src>

<mosaic_0001>
module attributes {stable_mosaic.version = 11 : i64} {
  func.func @_ffn_kernel(%arg0: i32, %arg1: i32, %arg2: memref<16x128xf32, #tpu.memory_space<vmem>>, %arg3: memref<128x256xf32, #tpu.memory_space<vmem>>, %arg4: memref<1x256xf32, #tpu.memory_space<vmem>>, %arg5: memref<256x128xf32, #tpu.memory_space<vmem>>, %arg6: memref<1x128xf32, #tpu.memory_space<vmem>>, %arg7: memref<16x128xf32, #tpu.memory_space<vmem>>, %arg8: memref<16x128xf32, #tpu.memory_space<vmem>>) attributes {dimension_semantics = [#tpu.dimension_semantics<parallel>, #tpu.dimension_semantics<arbitrary>], iteration_bounds = array<i64: 1, 1>, scalar_prefetch = 0 : i64, scratch_operands = 1 : i64, tpu.core_type = #tpu.core_type<tc>, window_params = [{transform_indices = @transform_0, window_bounds = array<i64: 16, 128>}, {transform_indices = @transform_1, window_bounds = array<i64: 128, 256>}, {transform_indices = @transform_2, window_bounds = array<i64: 1, 256>}, {transform_indices = @transform_3, window_bounds = array<i64: 256, 128>}, {pipeline_mode = #tpu.pipeline_mode<synchronous>, transform_indices = @transform_4, window_bounds = array<i64: 1, 128>}, {transform_indices = @transform_5, window_bounds = array<i64: 16, 128>}]} {
    %c0_i32 = arith.constant 0 : i32
    %0 = arith.cmpi eq, %arg1, %c0_i32 : i32
    %1 = arith.extui %0 : i1 to i32
    %c0_i32_0 = arith.constant 0 : i32
    %2 = arith.cmpi ne, %1, %c0_i32_0 : i32
    scf.if %2 {
      %cst_19 = arith.constant 0.000000e+00 : f32
      %30 = vector.broadcast %cst_19 : f32 to vector<16x128xf32>
      %c0_20 = arith.constant 0 : index
      %c0_21 = arith.constant 0 : index
      %31 = vector.load %arg8[%c0_20, %c0_21] : memref<16x128xf32, #tpu.memory_space<vmem>>, vector<16x128xf32>
      tpu.vector_store %arg8[%c0_20, %c0_21], %30 {strides = array<i32>} : memref<16x128xf32, #tpu.memory_space<vmem>>, vector<16x128xf32>,
    } else {
    }
    %c0 = arith.constant 0 : index
    %c0_1 = arith.constant 0 : index
    %3 = vector.load %arg2[%c0, %c0_1] : memref<16x128xf32, #tpu.memory_space<vmem>>, vector<16x128xf32>
    %c0_2 = arith.constant 0 : index
    %c0_3 = arith.constant 0 : index
    %4 = vector.load %arg3[%c0_2, %c0_3] : memref<128x256xf32, #tpu.memory_space<vmem>>, vector<128x256xf32>
    %cst = arith.constant dense<0.000000e+00> : vector<16x256xf32>
    %5 = tpu.matmul %3, %4, %cst {dimension_numbers = #tpu.dot_dimension_numbers<[1], [0], [0], [1], [0, 0, 1, 1], [], []>} : vector<16x128xf32>, vector<128x256xf32>, vector<16x256xf32> -> vector<16x256xf32>
    %c0_4 = arith.constant 0 : index
    %c0_5 = arith.constant 0 : index
    %6 = vector.load %arg4[%c0_4, %c0_5] : memref<1x256xf32, #tpu.memory_space<vmem>>, vector<1x256xf32>
    %7 = vector.broadcast %6 : vector<1x256xf32> to vector<16x256xf32>
    %8 = arith.addf %5, %7 : vector<16x256xf32>
    %cst_6 = arith.constant 5.000000e-01 : f32
    %9 = vector.broadcast %cst_6 : f32 to vector<16x256xf32>
    %10 = arith.mulf %9, %8 : vector<16x256xf32>
    %cst_7 = arith.constant 4.471500e-02 : f32
    %11 = vector.broadcast %cst_7 : f32 to vector<16x256xf32>
    %12 = arith.mulf %11, %8 : vector<16x256xf32>
    %13 = arith.mulf %12, %8 : vector<16x256xf32>
    %14 = arith.mulf %13, %8 : vector<16x256xf32>
    %15 = arith.addf %8, %14 : vector<16x256xf32>
    %cst_8 = arith.constant 0.797884583 : f32
    %16 = vector.broadcast %cst_8 : f32 to vector<16x256xf32>
    %17 = arith.mulf %16, %15 : vector<16x256xf32>
    %18 = math.tanh %17 : vector<16x256xf32>
    %cst_9 = arith.constant 1.000000e+00 : f32
    %19 = vector.broadcast %cst_9 : f32 to vector<16x256xf32>
    %20 = arith.addf %19, %18 : vector<16x256xf32>
    %21 = arith.mulf %10, %20 : vector<16x256xf32>
    %c0_10 = arith.constant 0 : index
    %c0_11 = arith.constant 0 : index
    %22 = vector.load %arg8[%c0_10, %c0_11] : memref<16x128xf32, #tpu.memory_space<vmem>>, vector<16x128xf32>
    %c0_12 = arith.constant 0 : index
    %c0_13 = arith.constant 0 : index
    %23 = vector.load %arg5[%c0_12, %c0_13] : memref<256x128xf32, #tpu.memory_space<vmem>>, vector<256x128xf32>
    %cst_14 = arith.constant dense<0.000000e+00> : vector<16x128xf32>
    %24 = tpu.matmul %21, %23, %cst_14 {dimension_numbers = #tpu.dot_dimension_numbers<[1], [0], [0], [1], [0, 0, 1, 1], [], []>} : vector<16x256xf32>, vector<256x128xf32>, vector<16x128xf32> -> vector<16x128xf32>
    %25 = arith.addf %22, %24 : vector<16x128xf32>
    %c0_15 = arith.constant 0 : index
    %c0_16 = arith.constant 0 : index
    %26 = vector.load %arg8[%c0_15, %c0_16] : memref<16x128xf32, #tpu.memory_space<vmem>>, vector<16x128xf32>
    tpu.vector_store %arg8[%c0_15, %c0_16], %25 {strides = array<i32>} : memref<16x128xf32, #tpu.memory_space<vmem>>, vector<16x128xf32>,
    %c0_i32_17 = arith.constant 0 : i32
    %27 = arith.cmpi eq, %arg1, %c0_i32_17 : i32
    %28 = arith.extui %27 : i1 to i32
    %c0_i32_18 = arith.constant 0 : i32
    %29 = arith.cmpi ne, %28, %c0_i32_18 : i32
    scf.if %29 {
      %c0_19 = arith.constant 0 : index
      %c0_20 = arith.constant 0 : index
      %30 = vector.load %arg8[%c0_19, %c0_20] : memref<16x128xf32, #tpu.memory_space<vmem>>, vector<16x128xf32>
      %c0_21 = arith.constant 0 : index
      %c0_22 = arith.constant 0 : index
      %31 = vector.load %arg6[%c0_21, %c0_22] : memref<1x128xf32, #tpu.memory_space<vmem>>, vector<1x128xf32>
      %32 = vector.broadcast %31 : vector<1x128xf32> to vector<16x128xf32>
      %33 = arith.addf %30, %32 : vector<16x128xf32>
      %c0_23 = arith.constant 0 : index
      %c0_24 = arith.constant 0 : index
      %34 = vector.load %arg7[%c0_23, %c0_24] : memref<16x128xf32, #tpu.memory_space<vmem>>, vector<16x128xf32>
      tpu.vector_store %arg7[%c0_23, %c0_24], %33 {strides = array<i32>} : memref<16x128xf32, #tpu.memory_space<vmem>>, vector<16x128xf32>,
    } else {
    }
    return
  }
  func.func @transform_0(%arg0: i32, %arg1: i32) -> (i32, i32) {
    %c0_i32 = arith.constant 0 : i32
    %c0_i32_0 = arith.constant 0 : i32
    return %arg0, %c0_i32 : i32, i32
  }
  func.func @transform_1(%arg0: i32, %arg1: i32) -> (i32, i32) {
    %c0_i32 = arith.constant 0 : i32
    %c0_i32_0 = arith.constant 0 : i32
    return %c0_i32, %arg1 : i32, i32
  }
  func.func @transform_2(%arg0: i32, %arg1: i32) -> (i32, i32) {
    %c0_i32 = arith.constant 0 : i32
    %c0_i32_0 = arith.constant 0 : i32
    return %c0_i32, %arg1 : i32, i32
  }
  func.func @transform_3(%arg0: i32, %arg1: i32) -> (i32, i32) {
    %c0_i32 = arith.constant 0 : i32
    %c0_i32_0 = arith.constant 0 : i32
    return %arg1, %c0_i32 : i32, i32
  }
  func.func @transform_4(%arg0: i32, %arg1: i32) -> (i32, i32) {
    %c0_i32 = arith.constant 0 : i32
    %c0_i32_0 = arith.constant 0 : i32
    %c0_i32_1 = arith.constant 0 : i32
    return %c0_i32, %c0_i32_0 : i32, i32
  }
  func.func @transform_5(%arg0: i32, %arg1: i32) -> (i32, i32) {
    %c0_i32 = arith.constant 0 : i32
    %c0_i32_0 = arith.constant 0 : i32
    return %arg0, %c0_i32 : i32, i32
  }
}

</mosaic_0001>

<llo_original>
// kernel: tpu_custom_call.1
$region0: #{tpu_custom_call.1}
  #allocation0 [shape = 'u32[]', space=smem, size = 0x4, offset = 0x4, fixed_abs, tag = 'smem constant byte address 0x4 - core index']
  #allocation1 [shape = 'u32[144,128]{1,0:T(1,128)}', space=vmem, size = 0x12000, scoped, tag = 'internal scratch']
  #allocation2 [shape = 'f32[16,128]{1,0:T(8,128)}', space=vmem, size = 0x2000, scoped, tag = 'scratch operand']
  %s0 = inlined_call_operand.hbm [shape: f32[16,128], index: 0, kind: input, shape index: {}]
  %s1 = inlined_call_operand.hbm [shape: f32[128,256], index: 1, kind: input, shape index: {}]
  %s2 = inlined_call_operand.vmem [shape: f32[1,256], index: 2, kind: input, shape index: {}]
  %s3 = inlined_call_operand.hbm [shape: f32[256,128], index: 3, kind: input, shape index: {}]
  %s4 = inlined_call_operand.vmem [shape: f32[1,128], index: 4, kind: input, shape index: {}]
  %s5 = inlined_call_operand.hbm [shape: f32[16,128], index: 5, kind: output, shape index: {}]
  %s6 = sld [smem:[#allocation0]]
  $region50: #{tpu_custom_call.1} parent=0
    _
  %s8 = ssub.s32 1, %s6
  %s9 = scalar_select 0, %s8, %s6
  $region1: #{tpu_custom_call.1} parent=0
    #allocation3 [shape = 'u8[8192]{0}', space=vmem, size = 0x2000, scoped, tag = 'input window, operand 0, single buffered']
    #allocation4 [shape = 's32[1]{0}', space=sflag, size = 0x4, scoped, tag = 'scoped memory for tpu_custom_call.1']
    #allocation5 [shape = 's32[1]{0}', space=sflag, size = 0x4, scoped, tag = 'scoped memory for tpu_custom_call.1']
    #allocation6 [shape = 'u8[131072]{0}', space=vmem, size = 0x20000, scoped, tag = 'input window, operand 1, single buffered']
    #allocation7 [shape = 's32[1]{0}', space=sflag, size = 0x4, scoped, tag = 'scoped memory for tpu_custom_call.1']
    #allocation8 [shape = 'u8[131072]{0}', space=vmem, size = 0x20000, scoped, tag = 'input window, operand 3, single buffered']
    #allocation9 [shape = 'u8[8192]{0}', space=vmem, size = 0x2000, scoped, tag = 'output window, operand 0, single buffered']
    %10 = vsyncpa [#allocation4], 0
    %11 = vsyncpa [#allocation7], 0
    %12 = vsyncpa [#allocation5], 0
    // Predicated region
    $region2: #{tpu_custom_call.1} parent=1 // pred_check
      _
    $region3: #{tpu_custom_call.1} parent=1 // pred_check_branch
      %14 = sbr.rel (0) target = $region5
    $region4: #{tpu_custom_call.1} parent=1 // pred_region
      %s16 = ssub.s32 256, 256
      %17 = vsyncadd [#allocation4], %s16
      %s18 = sshll.u32 [#allocation3], 4
      %s19 = int_to_ptr.vmem [resolvable:$true] %s18
      %24 = dma.hbm_to_vmem [thread:$0]  %s0, 256, %s19, [#allocation4], 128, 128, 8
    $region5: #{tpu_custom_call.1} parent=1 // pred_fallthru
      _
    // Predicated region
    $region6: #{tpu_custom_call.1} parent=1 // pred_check
      _
    $region7: #{tpu_custom_call.1} parent=1 // pred_check_branch
      %26 = sbr.rel (0) target = $region9
    $region8: #{tpu_custom_call.1} parent=1 // pred_region
      %s28 = ssub.s32 4096, 4096
      %29 = vsyncadd [#allocation7], %s28
      %s30 = sshll.u32 [#allocation6], 4
      %s31 = int_to_ptr.vmem [resolvable:$true] %s30
      %36 = dma.hbm_to_vmem [thread:$0]  %s1, 4096, %s31, [#allocation7], 256, 256, 16
    $region9: #{tpu_custom_call.1} parent=1 // pred_fallthru
      _
    // Predicated region
    $region10: #{tpu_custom_call.1} parent=1 // pred_check
      _
    $region11: #{tpu_custom_call.1} parent=1 // pred_check_branch
      %38 = sbr.rel (0) target = $region13
    $region12: #{tpu_custom_call.1} parent=1 // pred_region
      _
    $region13: #{tpu_custom_call.1} parent=1 // pred_fallthru
      _
    // Predicated region
    $region14: #{tpu_custom_call.1} parent=1 // pred_check
      _
    $region15: #{tpu_custom_call.1} parent=1 // pred_check_branch
      %40 = sbr.rel (0) target = $region17
    $region16: #{tpu_custom_call.1} parent=1 // pred_region
      %s42 = ssub.s32 4096, 4096
      %43 = vsyncadd [#allocation7], %s42
      %s44 = sshll.u32 [#allocation8], 4
      %s45 = int_to_ptr.vmem [resolvable:$true] %s44
      %50 = dma.hbm_to_vmem [thread:$0]  %s3, 4096, %s45, [#allocation7], 128, 128, 8
    $region17: #{tpu_custom_call.1} parent=1 // pred_fallthru
      _
    // Predicated region
    $region18: #{tpu_custom_call.1} parent=1 // pred_check
      _
    $region19: #{tpu_custom_call.1} parent=1 // pred_check_branch
      %52 = sbr.rel (0) target = $region21
    $region20: #{tpu_custom_call.1} parent=1 // pred_region
      _
    $region21: #{tpu_custom_call.1} parent=1 // pred_fallthru
      _
    // Predicated region
    $region22: #{tpu_custom_call.1} parent=1 // pred_check
      _
    $region23: #{tpu_custom_call.1} parent=1 // pred_check_branch
      %54 = sbr.rel (0) target = $region25
    $region24: #{tpu_custom_call.1} parent=1 // pred_region
      %55 = dma.done [#allocation4], 256
    $region25: #{tpu_custom_call.1} parent=1 // pred_fallthru
      _
    // Predicated region
    $region26: #{tpu_custom_call.1} parent=1 // pred_check
      _
    $region27: #{tpu_custom_call.1} parent=1 // pred_check_branch
      %57 = sbr.rel (0) target = $region29
    $region28: #{tpu_custom_call.1} parent=1 // pred_region
      %58 = dma.done [#allocation7], 4096
    $region29: #{tpu_custom_call.1} parent=1 // pred_fallthru
      _
    // Predicated region
    $region30: #{tpu_custom_call.1} parent=1 // pred_check
      _
    $region31: #{tpu_custom_call.1} parent=1 // pred_check_branch
      %60 = sbr.rel (0) target = $region33
    $region32: #{tpu_custom_call.1} parent=1 // pred_region
      %61 = dma.done [#allocation7], 4096
    $region33: #{tpu_custom_call.1} parent=1 // pred_fallthru
      _
    %p62 = scmp.eq.s32.totalorder 0, 0
    // Predicated region
    $region34: #{tpu_custom_call.1} parent=1 // pred_check
      %p63 = pneg %p62
    $region35: #{tpu_custom_call.1} parent=1 // pred_check_branch
      %65 = sbr.rel (%p63) target = $region37
    $region36: #{tpu_custom_call.1} parent=1 // pred_region
      %66 = vst [vmem:[#allocation2] sm:$0xff] 0.0
      %67 = vst [vmem:[#allocation2 + $0x8] sm:$0xff] 0.0
    $region37: #{tpu_custom_call.1} parent=1 // pred_fallthru
      _
    %v68 = vld [vmem:[#allocation3] sm:$0xff]
    %v69 = vld [vmem:[#allocation3 + $0x8] sm:$0xff]
    %v70 = vld [vmem:[#allocation6] sm:$0xff]
    %v71 = vld [vmem:[#allocation6 + $0x8] sm:$0xff]
    %v72 = vld [vmem:[#allocation6 + $0x10] sm:$0xff]
    %v73 = vld [vmem:[#allocation6 + $0x18] sm:$0xff]
    %v74 = vld [vmem:[#allocation6 + $0x20] sm:$0xff]
    %v75 = vld [vmem:[#allocation6 + $0x28] sm:$0xff]
    %v76 = vld [vmem:[#allocation6 + $0x30] sm:$0xff]
    %v77 = vld [vmem:[#allocation6 + $0x38] sm:$0xff]
    %v78 = vld [vmem:[#allocation6 + $0x40] sm:$0xff]
    %v79 = vld [vmem:[#allocation6 + $0x48] sm:$0xff]
    %v80 = vld [vmem:[#allocation6 + $0x50] sm:$0xff]
    %v81 = vld [vmem:[#allocation6 + $0x58] sm:$0xff]
    %v82 = vld [vmem:[#allocation6 + $0x60] sm:$0xff]
    %v83 = vld [vmem:[#allocation6 + $0x68] sm:$0xff]
    %v84 = vld [vmem:[#allocation6 + $0x70] sm:$0xff]
    %v85 = vld [vmem:[#allocation6 + $0x78] sm:$0xff]
    %v86 = vld [vmem:[#allocation6 + $0x80] sm:$0xff]
    %v87 = vld [vmem:[#allocation6 + $0x88] sm:$0xff]
    %v88 = vld [vmem:[#allocation6 + $0x90] sm:$0xff]
    %v89 = vld [vmem:[#allocation6 + $0x98] sm:$0xff]
    %v90 = vld [vmem:[#allocation6 + $0xa0] sm:$0xff]
    %v91 = vld [vmem:[#allocation6 + $0xa8] sm:$0xff]
    %v92 = vld [vmem:[#allocation6 + $0xb0] sm:$0xff]
    %v93 = vld [vmem:[#allocation6 + $0xb8] sm:$0xff]
    %v94 = vld [vmem:[#allocation6 + $0xc0] sm:$0xff]
    %v95 = vld [vmem:[#allocation6 + $0xc8] sm:$0xff]
    %v96 = vld [vmem:[#allocation6 + $0xd0] sm:$0xff]
    %v97 = vld [vmem:[#allocation6 + $0xd8] sm:$0xff]
    %v98 = vld [vmem:[#allocation6 + $0xe0] sm:$0xff]
    %v99 = vld [vmem:[#allocation6 + $0xe8] sm:$0xff]
    %v100 = vld [vmem:[#allocation6 + $0xf0] sm:$0xff]
    %v101 = vld [vmem:[#allocation6 + $0xf8] sm:$0xff]
    %v102 = vld [vmem:[%s2] sm:$0x3]
    %v104 = vlaneseq
    %v105 = vshrl.u32 %v104, 7
    %v106 = vsub.s32 0, %v105
    %v107 = vrot.slane %v102, %v106
    %v108 = vlaneseq
    %v109 = vshrl.u32 %v108, 7
    %v110 = vsub.s32 1, %v109
    %v111 = vrot.slane %v102, %v110
    %114 = vmatprep.subr.mxu0 %v71
    %115 = vmatpush1.msra.mxu0 %v70
    %116 = vmatprep.subr.mxu0 %v73
    %117 = vmatpush1.msra.mxu0 %v72
    %118 = vmatprep.subr.mxu0 %v75
    %119 = vmatpush1.msra.mxu0 %v74
    %120 = vmatprep.subr.mxu0 %v77
    %121 = vmatpush1.msra.mxu0 %v76
    %122 = vmatprep.subr.mxu0 %v79
    %123 = vmatpush1.msra.mxu0 %v78
    %124 = vmatprep.subr.mxu0 %v81
    %125 = vmatpush1.msra.mxu0 %v80
    %126 = vmatprep.subr.mxu0 %v83
    %127 = vmatpush1.msra.mxu0 %v82
    %128 = vmatprep.subr.mxu0 %v85
    %129 = vmatpush1.msra.mxu0 %v84
    %130 = vmatprep.subr.mxu0 %v87
    %131 = vmatpush1.msra.mxu0 %v86
    %132 = vmatprep.subr.mxu0 %v89
    %133 = vmatpush1.msra.mxu0 %v88
    %134 = vmatprep.subr.mxu0 %v91
    %135 = vmatpush1.msra.mxu0 %v90
    %136 = vmatprep.subr.mxu0 %v93
    %137 = vmatpush1.msra.mxu0 %v92
    %138 = vmatprep.subr.mxu0 %v95
    %139 = vmatpush1.msra.mxu0 %v94
    %140 = vmatprep.subr.mxu0 %v97
    %141 = vmatpush1.msra.mxu0 %v96
    %142 = vmatprep.subr.mxu0 %v99
    %143 = vmatpush1.msra.mxu0 %v98
    %144 = vmatprep.subr.mxu0 %v101
    %145 = vmatpush1.msra.mxu0 %v100
    %146 = vmatprep.subr.mxu0 0.0
    %147 = vmatpush1.msra.mxu0 0.0
    %148 = vmatprep.subr.mxu0 0.0
    %149 = vmatpush1.msra.mxu0 0.0
    %150 = vmatprep.subr.mxu0 0.0
    %151 = vmatpush1.msra.mxu0 0.0
    %152 = vmatprep.subr.mxu0 0.0
    %153 = vmatpush1.msra.mxu0 0.0
    %154 = vmatprep.subr.mxu0 0.0
    %155 = vmatpush1.msra.mxu0 0.0
    %156 = vmatprep.subr.mxu0 0.0
    %157 = vmatpush1.msra.mxu0 0.0
    %158 = vmatprep.subr.mxu0 0.0
    %159 = vmatpush1.msra.mxu0 0.0
    %160 = vmatprep.subr.mxu0 0.0
    %161 = vmatpush1.msra.mxu0 0.0
    %162 = vmatprep.subr.mxu0 0.0
    %163 = vmatpush1.msra.mxu0 0.0
    %164 = vmatprep.subr.mxu0 0.0
    %165 = vmatpush1.msra.mxu0 0.0
    %166 = vmatprep.subr.mxu0 0.0
    %167 = vmatpush1.msra.mxu0 0.0
    %168 = vmatprep.subr.mxu0 0.0
    %169 = vmatpush1.msra.mxu0 0.0
    %170 = vmatprep.subr.mxu0 0.0
    %171 = vmatpush1.msra.mxu0 0.0
    %172 = vmatprep.subr.mxu0 0.0
    %173 = vmatpush1.msra.mxu0 0.0
    %174 = vmatprep.subr.mxu0 0.0
    %175 = vmatpush1.msra.mxu0 0.0
    %176 = vmatprep.subr.mxu0 0.0
    %177 = vmatpush1.msra.mxu0 0.0
    %178 = vmatprep.mubr.f32.mxu0 0.0
    %179 = vmatmul.mubr.f32.gmra.mrb[0].mxu0 %v68
    %v180 = vpop.f32.mrb[0].mxu0
    %v181 = vadd.f32 %v107, %v180
    %v182 = vpop.f32.mrb[0].mxu0
    %v183 = vadd.f32 %v111, %v182
    %184 = vmatprep.mubr.f32.mxu0 0.0
    %185 = vmatmul.mubr.f32.gmra.mrb[0].mxu0 %v69
    %v186 = vpop.f32.mrb[0].mxu0
    %v187 = vadd.f32 %v107, %v186
    %v188 = vpop.f32.mrb[0].mxu0
    %v189 = vadd.f32 %v111, %v188
    %190 = vdwg.mxu0
    %v191 = vmul.f32 %v181, 0.5
    %v192 = vmul.f32 %v183, 0.5
    %v193 = vmul.f32 %v187, 0.5
    %v194 = vmul.f32 %v189, 0.5
    %v195 = vmul.f32 %v181, 0.044715
    %v196 = vmul.f32 %v183, 0.044715
    %v197 = vmul.f32 %v187, 0.044715
    %v198 = vmul.f32 %v189, 0.044715
    %v199 = vmul.f32 %v195, %v181
    %v200 = vmul.f32 %v196, %v183
    %v201 = vmul.f32 %v197, %v187
    %v202 = vmul.f32 %v198, %v189
    %v203 = vmul.f32 %v199, %v181
    %v204 = vmul.f32 %v200, %v183
    %v205 = vmul.f32 %v201, %v187
    %v206 = vmul.f32 %v202, %v189
    %v207 = vadd.f32 %v181, %v203
    %v208 = vadd.f32 %v183, %v204
    %v209 = vadd.f32 %v187, %v205
    %v210 = vadd.f32 %v189, %v206
    %v211 = vmul.f32 %v207, 0.7978846
    %v212 = vmul.f32 %v208, 0.7978846
    %v213 = vmul.f32 %v209, 0.7978846
    %v214 = vmul.f32 %v210, 0.7978846
    %v215 = vtanh.pop %v211
    %v216 = vtanh.pop %v212
    %v217 = vtanh.pop %v213
    %v218 = vtanh.pop %v214
    %v219 = vadd.f32 %v215, 1.0
    %v220 = vadd.f32 %v216, 1.0
    %v221 = vadd.f32 %v217, 1.0
    %v222 = vadd.f32 %v218, 1.0
    %v223 = vmul.f32 %v191, %v219
    %v224 = vmul.f32 %v192, %v220
    %v225 = vmul.f32 %v193, %v221
    %v226 = vmul.f32 %v194, %v222
    %v227 = vld [vmem:[#allocation2] sm:$0xff]
    %v228 = vld [vmem:[#allocation2 + $0x8] sm:$0xff]
    %v229 = vld [vmem:[#allocation8] sm:$0xff]
    %v230 = vld [vmem:[#allocation8 + $0x8] sm:$0xff]
    %v231 = vld [vmem:[#allocation8 + $0x10] sm:$0xff]
    %v232 = vld [vmem:[#allocation8 + $0x18] sm:$0xff]
    %v233 = vld [vmem:[#allocation8 + $0x20] sm:$0xff]
    %v234 = vld [vmem:[#allocation8 + $0x28] sm:$0xff]
    %v235 = vld [vmem:[#allocation8 + $0x30] sm:$0xff]
    %v236 = vld [vmem:[#allocation8 + $0x38] sm:$0xff]
    %v237 = vld [vmem:[#allocation8 + $0x40] sm:$0xff]
    %v238 = vld [vmem:[#allocation8 + $0x48] sm:$0xff]
    %v239 = vld [vmem:[#allocation8 + $0x50] sm:$0xff]
    %v240 = vld [vmem:[#allocation8 + $0x58] sm:$0xff]
    %v241 = vld [vmem:[#allocation8 + $0x60] sm:$0xff]
    %v242 = vld [vmem:[#allocation8 + $0x68] sm:$0xff]
    %v243 = vld [vmem:[#allocation8 + $0x70] sm:$0xff]
    %v244 = vld [vmem:[#allocation8 + $0x78] sm:$0xff]
    %v245 = vld [vmem:[#allocation8 + $0x80] sm:$0xff]
    %v246 = vld [vmem:[#allocation8 + $0x88] sm:$0xff]
    %v247 = vld [vmem:[#allocation8 + $0x90] sm:$0xff]
    %v248 = vld [vmem:[#allocation8 + $0x98] sm:$0xff]
    %v249 = vld [vmem:[#allocation8 + $0xa0] sm:$0xff]
    %v250 = vld [vmem:[#allocation8 + $0xa8] sm:$0xff]
    %v251 = vld [vmem:[#allocation8 + $0xb0] sm:$0xff]
    %v252 = vld [vmem:[#allocation8 + $0xb8] sm:$0xff]
    %v253 = vld [vmem:[#allocation8 + $0xc0] sm:$0xff]
    %v254 = vld [vmem:[#allocation8 + $0xc8] sm:$0xff]
    %v255 = vld [vmem:[#allocation8 + $0xd0] sm:$0xff]
    %v256 = vld [vmem:[#allocation8 + $0xd8] sm:$0xff]
    %v257 = vld [vmem:[#allocation8 + $0xe0] sm:$0xff]
    %v258 = vld [vmem:[#allocation8 + $0xe8] sm:$0xff]
    %v259 = vld [vmem:[#allocation8 + $0xf0] sm:$0xff]
    %v260 = vld [vmem:[#allocation8 + $0xf8] sm:$0xff]
    %261 = vmatprep.subr.mxu0 0.0
    %262 = vmatpush1.msra.mxu0 %v229
    %263 = vmatprep.subr.mxu0 0.0
    %264 = vmatpush1.msra.mxu0 %v230
    %265 = vmatprep.subr.mxu0 0.0
    %266 = vmatpush1.msra.mxu0 %v231
    %267 = vmatprep.subr.mxu0 0.0
    %268 = vmatpush1.msra.mxu0 %v232
    %269 = vmatprep.subr.mxu0 0.0
    %270 = vmatpush1.msra.mxu0 %v233
    %271 = vmatprep.subr.mxu0 0.0
    %272 = vmatpush1.msra.mxu0 %v234
    %273 = vmatprep.subr.mxu0 0.0
    %274 = vmatpush1.msra.mxu0 %v235
    %275 = vmatprep.subr.mxu0 0.0
    %276 = vmatpush1.msra.mxu0 %v236
    %277 = vmatprep.subr.mxu0 0.0
    %278 = vmatpush1.msra.mxu0 %v237
    %279 = vmatprep.subr.mxu0 0.0
    %280 = vmatpush1.msra.mxu0 %v238
    %281 = vmatprep.subr.mxu0 0.0
    %282 = vmatpush1.msra.mxu0 %v239
    %283 = vmatprep.subr.mxu0 0.0
    %284 = vmatpush1.msra.mxu0 %v240
    %285 = vmatprep.subr.mxu0 0.0
    %286 = vmatpush1.msra.mxu0 %v241
    %287 = vmatprep.subr.mxu0 0.0
    %288 = vmatpush1.msra.mxu0 %v242
    %289 = vmatprep.subr.mxu0 0.0
    %290 = vmatpush1.msra.mxu0 %v243
    %291 = vmatprep.subr.mxu0 0.0
    %292 = vmatpush1.msra.mxu0 %v244
    %293 = vmatprep.subr.mxu0 0.0
    %294 = vmatpush1.msra.mxu0 %v245
    %295 = vmatprep.subr.mxu0 0.0
    %296 = vmatpush1.msra.mxu0 %v246
    %297 = vmatprep.subr.mxu0 0.0
    %298 = vmatpush1.msra.mxu0 %v247
    %299 = vmatprep.subr.mxu0 0.0
    %300 = vmatpush1.msra.mxu0 %v248
    %301 = vmatprep.subr.mxu0 0.0
    %302 = vmatpush1.msra.mxu0 %v249
    %303 = vmatprep.subr.mxu0 0.0
    %304 = vmatpush1.msra.mxu0 %v250
    %305 = vmatprep.subr.mxu0 0.0
    %306 = vmatpush1.msra.mxu0 %v251
    %307 = vmatprep.subr.mxu0 0.0
    %308 = vmatpush1.msra.mxu0 %v252
    %309 = vmatprep.subr.mxu0 0.0
    %310 = vmatpush1.msra.mxu0 %v253
    %311 = vmatprep.subr.mxu0 0.0
    %312 = vmatpush1.msra.mxu0 %v254
    %313 = vmatprep.subr.mxu0 0.0
    %314 = vmatpush1.msra.mxu0 %v255
    %315 = vmatprep.subr.mxu0 0.0
    %316 = vmatpush1.msra.mxu0 %v256
    %317 = vmatprep.subr.mxu0 0.0
    %318 = vmatpush1.msra.mxu0 %v257
    %319 = vmatprep.subr.mxu0 0.0
    %320 = vmatpush1.msra.mxu0 %v258
    %321 = vmatprep.subr.mxu0 0.0
    %322 = vmatpush1.msra.mxu0 %v259
    %323 = vmatprep.subr.mxu0 0.0
    %324 = vmatpush1.msra.mxu0 %v260
    %325 = vmatprep.mubr.f32.mxu0 %v224
    %326 = vmatmul.mubr.f32.gmra.mrb[0].mxu0 %v223
    %v327 = vpop.f32.mrb[0].mxu0
    %v328 = vadd.f32 0.0, %v327
    %v329 = vpop.f32.mrb[0].mxu0
    %330 = vmatprep.mubr.f32.mxu0 %v226
    %331 = vmatmul.mubr.f32.gmra.mrb[0].mxu0 %v225
    %v332 = vpop.f32.mrb[0].mxu0
    %v333 = vadd.f32 0.0, %v332
    %v334 = vpop.f32.mrb[0].mxu0
    %335 = vdwg.mxu0
    %v336 = vadd.f32 %v227, %v328
    %v337 = vadd.f32 %v228, %v333
    %338 = vst [vmem:[#allocation2] sm:$0xff] %v336
    %339 = vst [vmem:[#allocation2 + $0x8] sm:$0xff] %v337
    // Predicated region
    $region38: #{tpu_custom_call.1} parent=1 // pred_check
      %p340 = pneg %p62
    $region39: #{tpu_custom_call.1} parent=1 // pred_check_branch
      %342 = sbr.rel (%p340) target = $region41
    $region40: #{tpu_custom_call.1} parent=1 // pred_region
      %v343 = vld [vmem:[#allocation2] sm:$0xff]
      %v344 = vld [vmem:[#allocation2 + $0x8] sm:$0xff]
      %v345 = vld [vmem:[%s4] sm:$0x1]
      %v347 = vlaneseq
      %v348 = vshrl.u32 %v347, 7
      %v349 = vsub.s32 0, %v348
      %v350 = vrot.slane %v345, %v349
      %v352 = vadd.f32 %v343, %v350
      %v353 = vadd.f32 %v344, %v350
      %354 = vst [vmem:[#allocation9] sm:$0xff] %v352
      %355 = vst [vmem:[#allocation9 + $0x8] sm:$0xff] %v353
    $region41: #{tpu_custom_call.1} parent=1 // pred_fallthru
      _
    // Predicated region
    $region42: #{tpu_custom_call.1} parent=1 // pred_check
      _
    $region43: #{tpu_custom_call.1} parent=1 // pred_check_branch
      %357 = sbr.rel (0) target = $region45
    $region44: #{tpu_custom_call.1} parent=1 // pred_region
      %s359 = ssub.s32 256, 256
      %360 = vsyncadd [#allocation5], %s359
      %s361 = sshll.u32 [#allocation9], 4
      %s362 = int_to_ptr.vmem [resolvable:$true] %s361
      %367 = dma.vmem_to_hbm [thread:$0]  %s362, 256, %s5, [#allocation5], 128, 128, 8
    $region45: #{tpu_custom_call.1} parent=1 // pred_fallthru
      _
    // Predicated region
    $region46: #{tpu_custom_call.1} parent=1 // pred_check
      _
    $region47: #{tpu_custom_call.1} parent=1 // pred_check_branch
      %369 = sbr.rel (0) target = $region49
    $region48: #{tpu_custom_call.1} parent=1 // pred_region
      %370 = dma.done [#allocation5], 256
    $region49: #{tpu_custom_call.1} parent=1 // pred_fallthru
      _
    %371 = vsyncpa [#allocation4], 1
    %372 = vsyncpa [#allocation7], 1
    %373 = vsyncpa [#allocation5], 1

</llo_original>
